<compile_context>
chip_gen: v5e
topology: v5e:2x2
jax: 0.10.0
libtpu: 0.0.40
codegen_flags: <defaults>
</compile_context>

<pallas_src>
import math

import jax
import jax.numpy as jnp
import numpy as np
from jax.experimental import pallas as pl
from jax.experimental.pallas import tpu as pltpu

_LOG_2PI = math.log(2.0 * math.pi)


def _round_up(x, m):
    return ((x + m - 1) // m) * m


def _gac_kernel(w_ref, p_ref, obs_ref, noise_ref, out_ref):
    """w:[D,WP] bf16, p:[8,WP] f32, obs:[TB,D] bf16, noise:[TB,A] f32, out:[TB,2A+2] f32.

    Packed param rows (all quantities start at lane 0):
      row 0: fused bias  [ba..., bc, 0...]        (WP lanes)
      row 1: sigma       (lanes 0:A)
      row 2: -0.5/sigma^2 (lanes 0:A)
      row 3, lane 0: logp_const = -(sum(log sigma) + A/2 * log 2pi)
    """
    A = noise_ref.shape[1]

    # Fused actor+critic head: one MXU pass (bf16 in, f32 accumulate).
    h = jnp.dot(obs_ref[...], w_ref[...],
                preferred_element_type=jnp.float32)            # [TB, WP]
    h = h + p_ref[0:1, :]                                      # lane-aligned bias row

    mean = jnp.tanh(h[:, :A])                                  # [TB, A]
    v = h[:, A:A + 1]                                          # [TB, 1]

    sigma = p_ref[1:2, :A]                                     # [1, A]
    neg_half_inv_var = p_ref[2:3, :A]                          # [1, A]
    logp_const = p_ref[3:4, 0:1]                               # [1, 1]

    # Reparameterized sample.
    action = mean + sigma * noise_ref[...]                     # [TB, A]

    # log_prob(action).sum(-1, keepdims): multiply by precomputed -0.5/sigma^2
    # (no divide); the batch-invariant terms are folded into logp_const.
    diff = action - mean
    logp = jnp.sum(neg_half_inv_var * (diff * diff),
                   axis=-1, keepdims=True) + logp_const        # [TB, 1]

    # Direct sub-slice stores; every lane of the (2A+2)-wide output is written,
    # no pad lanes, no concatenate temp.
    out_ref[:, :A] = action
    out_ref[:, A:2 * A] = mean
    out_ref[:, 2 * A:2 * A + 1] = logp
    out_ref[:, 2 * A + 1:2 * A + 2] = v


def _choose_batch_tile(B, D, A, outw, wp):
    """Pick TB (multiple of 16) and padded batch Bp."""
    if B <= 256:
        TB = _round_up(B, 16)                       # tiny batch: single tile
    elif B <= 2048:
        TB = _round_up(-(-B // 2), 16)              # >=2 grid steps -> both v7x TCs
    else:
        best = None
        for cand in (1024, 512, 256, 128):          # 1024-row tiles ~ HBM roofline
            pad = (-B) % cand
            if best is None or pad < best[0]:
                best = (pad, cand)
        TB = best[1]

    def footprint(tb):                              # double-buffered VMEM estimate
        return (2 * tb * D * 2                      # obs bf16
                + 2 * tb * A * 4                    # noise f32
                + 2 * tb * outw * 4                 # out f32
                + tb * wp * 4                       # matmul result temp
                + D * wp * 2 + 8 * wp * 4)          # resident weight + params

    # Stay under v5e's 16 MiB default scoped VMEM (also safe for v7x's 32 MiB scoped).
    while TB > 16 and footprint(TB) > 12 * 2 ** 20:
        TB = max(16, _round_up(TB // 2, 16))

    Bp = _round_up(B, TB)
    return TB, Bp


def gaussian_actor_critic_forward(obs, wa, ba, wc, bc, std, noise):
    """obs:[B,D], wa:[A,D], ba:[A], wc:[1,D], bc:[1], std:[A], noise:[B,A]."""
    B, D = obs.shape
    A = wa.shape[0]
    WP = _round_up(A + 1, 128)          # lane-padded fused head width
    OUTW = 2 * A + 2                    # action | mean | log_pi | v  (no pad lanes)

    # ---- host-side packing: fused weights + std-only math ----
    # Note: bf16 weights/obs trade a little precision for halved read bandwidth; keep
    # the matmul in f32 if strict parity with the f32 PyTorch reference is required.
    w_fused = (jnp.zeros((D, WP), jnp.float32)
               .at[:, :A].set(wa.T.astype(jnp.float32))
               .at[:, A:A + 1].set(wc.T.astype(jnp.float32))
               .astype(jnp.bfloat16))                                    # [D, WP]

    sigma = jax.nn.softplus(jnp.reshape(std, (1, A)).astype(jnp.float32))
    log_sigma = jnp.log(sigma)
    neg_half_inv_var = -0.5 / (sigma * sigma)
    logp_const = -(jnp.sum(log_sigma) + 0.5 * A * _LOG_2PI)              # scalar

    params = (jnp.zeros((8, WP), jnp.float32)
              .at[0, :A].set(jnp.reshape(ba, (A,)).astype(jnp.float32))
              .at[0, A].set(jnp.reshape(bc, ()).astype(jnp.float32))
              .at[1, :A].set(sigma[0])
              .at[2, :A].set(neg_half_inv_var[0])
              .at[3, 0].set(logp_const))                                 # [8, WP]

    # Entropy is batch-invariant -> computed entirely in the wrapper.
    ent = jnp.broadcast_to(
        jnp.sum(0.5 + 0.5 * _LOG_2PI + log_sigma, axis=-1, keepdims=True), (B, 1))

    # ---- batch tiling ----
    TB, Bp = _choose_batch_tile(B, D, A, OUTW, WP)
    obs_b = obs.astype(jnp.bfloat16)
    noise_f = noise.astype(jnp.float32)
    if Bp != B:                                       # single fused convert+pad pass
        obs_b = jnp.pad(obs_b, ((0, Bp - B), (0, 0)))
        noise_f = jnp.pad(noise_f, ((0, Bp - B), (0, 0)))

    fn = pl.pallas_call(
        _gac_kernel,
        out_shape=jax.ShapeDtypeStruct((Bp, OUTW), jnp.float32),
        grid=(Bp // TB,),
        in_specs=[
            pl.BlockSpec((D, WP), lambda i: (0, 0)),      # fused weight (grid-invariant)
            pl.BlockSpec((8, WP), lambda i: (0, 0)),      # packed params (grid-invariant)
            pl.BlockSpec((TB, D), lambda i: (i, 0)),      # obs tile
            pl.BlockSpec((TB, A), lambda i: (i, 0)),      # noise tile
        ],
        out_specs=pl.BlockSpec((TB, OUTW), lambda i: (i, 0)),
        compiler_params=pltpu.CompilerParams(
            dimension_semantics=("parallel",)),           # megacore sharding on v7x
    )
    slab = fn(w_fused, params, obs_b, noise_f)[:B]        # [B, 2A+2]

    action = slab[:, :A]
    mean = slab[:, A:2 * A]
    logp = slab[:, 2 * A:2 * A + 1]
    v = slab[:, 2 * A + 1:2 * A + 2]
    return {'a': action, 'log_pi_a': logp, 'ent': ent, 'mean': mean, 'v': v}


def _orthogonal_linear_weight(key, out_dim, in_dim, scale):
    """Deterministic stand-in for torch.nn.init.orthogonal_ * scale, shape [out, in]."""
    if out_dim <= in_dim:
        g = jax.random.normal(key, (in_dim, out_dim), dtype=jnp.float32)
        q, _ = jnp.linalg.qr(g)          # [in, out], orthonormal columns
        w = q.T                          # [out, in]
    else:
        g = jax.random.normal(key, (out_dim, in_dim), dtype=jnp.float32)
        q, _ = jnp.linalg.qr(g)          # [out, in]
        w = q
    return w * scale


if __name__ == "__main__":
    B, D, A = 8, 32, 8   # batch, state_dim, action_dim

    key = jax.random.PRNGKey(0)
    k_obs, k_wa, k_wc, k_noise = jax.random.split(key, 4)

    # Parameters (mimicking layer_init with w_scale=0.001, bias=0, std=0).
    wa = _orthogonal_linear_weight(k_wa, A, D, 0.001)      # fc_action.weight [A, D]
    ba = jnp.zeros((A,), jnp.float32)                      # fc_action.bias
    wc = _orthogonal_linear_weight(k_wc, 1, D, 0.001)      # fc_critic.weight [1, D]
    bc = jnp.zeros((1,), jnp.float32)                      # fc_critic.bias
    std = jnp.zeros((A,), jnp.float32)                     # nn.Parameter(torch.zeros(A))

    obs = jax.random.normal(k_obs, (B, D), dtype=jnp.float32)
    noise = jax.random.normal(k_noise, (B, A), dtype=jnp.float32)  # stand-in for Normal.sample()

    out = gaussian_actor_critic_forward(obs, wa, ba, wc, bc, std, noise)
    out = jax.block_until_ready(out)

    # Sanity check against a plain-JAX f32 reference (bf16 matmul inputs stay well
    # inside these tolerances at these magnitudes).
    sigma_ref = jax.nn.softplus(std).reshape(1, A)
    mean_ref = jnp.tanh(obs @ wa.T + ba.reshape(1, A))
    v_ref = obs @ wc.T + bc.reshape(1, 1)
    a_ref = mean_ref + sigma_ref * noise
    logp_ref = jnp.sum(
        -((a_ref - mean_ref) ** 2) / (2.0 * sigma_ref ** 2)
        - jnp.log(sigma_ref) - 0.5 * _LOG_2PI, axis=-1, keepdims=True)
    ent_ref = jnp.broadcast_to(
        jnp.sum(0.5 + 0.5 * _LOG_2PI + jnp.log(sigma_ref), axis=-1, keepdims=True),
        (B, 1))

    assert np.allclose(out['mean'], mean_ref, atol=1e-4), "mean mismatch"
    assert np.allclose(out['v'], v_ref, atol=1e-4), "v mismatch"
    assert np.allclose(out['a'], a_ref, atol=1e-4), "action mismatch"
    assert np.allclose(out['log_pi_a'], logp_ref, atol=1e-4), "log_pi mismatch"
    assert np.allclose(out['ent'], ent_ref, atol=1e-5), "entropy mismatch"

    print("KERNEL_OK")
</pallas_src>

<mosaic_0001>
module attributes {stable_mosaic.version = 11 : i64} {
  func.func @_gac_kernel(%arg0: i32, %arg1: memref<32x128xbf16, #tpu.memory_space<vmem>>, %arg2: memref<8x128xf32, #tpu.memory_space<vmem>>, %arg3: memref<16x32xbf16, #tpu.memory_space<vmem>>, %arg4: memref<16x8xf32, #tpu.memory_space<vmem>>, %arg5: memref<16x18xf32, #tpu.memory_space<vmem>>) attributes {dimension_semantics = [#tpu.dimension_semantics<parallel>], iteration_bounds = array<i64: 1>, scalar_prefetch = 0 : i64, scratch_operands = 0 : i64, tpu.core_type = #tpu.core_type<tc>, window_params = [{pipeline_mode = #tpu.pipeline_mode<synchronous>, transform_indices = @transform_0, window_bounds = array<i64: 32, 128>}, {pipeline_mode = #tpu.pipeline_mode<synchronous>, transform_indices = @transform_1, window_bounds = array<i64: 8, 128>}, {transform_indices = @transform_2, window_bounds = array<i64: 16, 32>}, {transform_indices = @transform_3, window_bounds = array<i64: 16, 8>}, {transform_indices = @transform_4, window_bounds = array<i64: 16, 18>}]} {
    %c0 = arith.constant 0 : index
    %c0_0 = arith.constant 0 : index
    %0 = vector.load %arg3[%c0, %c0_0] : memref<16x32xbf16, #tpu.memory_space<vmem>>, vector<16x32xbf16>
    %c0_1 = arith.constant 0 : index
    %c0_2 = arith.constant 0 : index
    %1 = vector.load %arg1[%c0_1, %c0_2] : memref<32x128xbf16, #tpu.memory_space<vmem>>, vector<32x128xbf16>
    %cst = arith.constant dense<0.000000e+00> : vector<16x128xf32>
    %2 = tpu.matmul %0, %1, %cst {dimension_numbers = #tpu.dot_dimension_numbers<[1], [0], [0], [1], [0, 0, 1, 1], [], []>} : vector<16x32xbf16>, vector<32x128xbf16>, vector<16x128xf32> -> vector<16x128xf32>
    %c0_3 = arith.constant 0 : index
    %c0_4 = arith.constant 0 : index
    %3 = vector.load %arg2[%c0_3, %c0_4] : memref<8x128xf32, #tpu.memory_space<vmem>>, vector<1x128xf32>
    %4 = vector.broadcast %3 : vector<1x128xf32> to vector<16x128xf32>
    %5 = arith.addf %2, %4 : vector<16x128xf32>
    %6 = vector.extract_strided_slice %5 {offsets = [0, 0], sizes = [16, 8], strides = [1, 1]} : vector<16x128xf32> to vector<16x8xf32>
    %7 = math.tanh %6 : vector<16x8xf32>
    %8 = vector.extract_strided_slice %5 {offsets = [0, 8], sizes = [16, 1], strides = [1, 1]} : vector<16x128xf32> to vector<16x1xf32>
    %c1 = arith.constant 1 : index
    %c0_5 = arith.constant 0 : index
    %9 = vector.load %arg2[%c1, %c0_5] : memref<8x128xf32, #tpu.memory_space<vmem>>, vector<1x8xf32>
    %c2 = arith.constant 2 : index
    %c0_6 = arith.constant 0 : index
    %10 = vector.load %arg2[%c2, %c0_6] : memref<8x128xf32, #tpu.memory_space<vmem>>, vector<1x8xf32>
    %c3 = arith.constant 3 : index
    %c0_7 = arith.constant 0 : index
    %11 = vector.load %arg2[%c3, %c0_7] : memref<8x128xf32, #tpu.memory_space<vmem>>, vector<1x1xf32>
    %c0_8 = arith.constant 0 : index
    %c0_9 = arith.constant 0 : index
    %12 = vector.load %arg4[%c0_8, %c0_9] : memref<16x8xf32, #tpu.memory_space<vmem>>, vector<16x8xf32>
    %13 = vector.broadcast %9 : vector<1x8xf32> to vector<16x8xf32>
    %14 = arith.mulf %13, %12 : vector<16x8xf32>
    %15 = arith.addf %7, %14 : vector<16x8xf32>
    %16 = arith.subf %15, %7 : vector<16x8xf32>
    %17 = arith.mulf %16, %16 : vector<16x8xf32>
    %18 = vector.broadcast %10 : vector<1x8xf32> to vector<16x8xf32>
    %19 = arith.mulf %18, %17 : vector<16x8xf32>
    %cst_10 = arith.constant dense<0.000000e+00> : vector<16xf32>
    %20 = vector.multi_reduction <add>, %19, %cst_10 [1] : vector<16x8xf32> to vector<16xf32>
    %21 = vector.shape_cast %20 : vector<16xf32> to vector<16x1xf32>
    %22 = vector.broadcast %11 : vector<1x1xf32> to vector<16x1xf32>
    %23 = arith.addf %21, %22 : vector<16x1xf32>
    %c0_11 = arith.constant 0 : index
    %c0_12 = arith.constant 0 : index
    %24 = vector.load %arg5[%c0_11, %c0_12] : memref<16x18xf32, #tpu.memory_space<vmem>>, vector<16x8xf32>
    tpu.vector_store %arg5[%c0_11, %c0_12], %15 {strides = array<i32>} : memref<16x18xf32, #tpu.memory_space<vmem>>, vector<16x8xf32>,
    %c0_13 = arith.constant 0 : index
    %c8 = arith.constant 8 : index
    %25 = vector.load %arg5[%c0_13, %c8] : memref<16x18xf32, #tpu.memory_space<vmem>>, vector<16x8xf32>
    tpu.vector_store %arg5[%c0_13, %c8], %7 {strides = array<i32>} : memref<16x18xf32, #tpu.memory_space<vmem>>, vector<16x8xf32>,
    %c0_14 = arith.constant 0 : index
    %c16 = arith.constant 16 : index
    %26 = vector.load %arg5[%c0_14, %c16] : memref<16x18xf32, #tpu.memory_space<vmem>>, vector<16x1xf32>
    tpu.vector_store %arg5[%c0_14, %c16], %23 {strides = array<i32>} : memref<16x18xf32, #tpu.memory_space<vmem>>, vector<16x1xf32>,
    %c0_15 = arith.constant 0 : index
    %c17 = arith.constant 17 : index
    %27 = vector.load %arg5[%c0_15, %c17] : memref<16x18xf32, #tpu.memory_space<vmem>>, vector<16x1xf32>
    tpu.vector_store %arg5[%c0_15, %c17], %8 {strides = array<i32>} : memref<16x18xf32, #tpu.memory_space<vmem>>, vector<16x1xf32>,
    return
  }
  func.func @transform_0(%arg0: i32) -> (i32, i32) {
    %c0_i32 = arith.constant 0 : i32
    %c0_i32_0 = arith.constant 0 : i32
    %c0_i32_1 = arith.constant 0 : i32
    return %c0_i32, %c0_i32_0 : i32, i32
  }
  func.func @transform_1(%arg0: i32) -> (i32, i32) {
    %c0_i32 = arith.constant 0 : i32
    %c0_i32_0 = arith.constant 0 : i32
    %c0_i32_1 = arith.constant 0 : i32
    return %c0_i32, %c0_i32_0 : i32, i32
  }
  func.func @transform_2(%arg0: i32) -> (i32, i32) {
    %c0_i32 = arith.constant 0 : i32
    %c0_i32_0 = arith.constant 0 : i32
    return %arg0, %c0_i32 : i32, i32
  }
  func.func @transform_3(%arg0: i32) -> (i32, i32) {
    %c0_i32 = arith.constant 0 : i32
    %c0_i32_0 = arith.constant 0 : i32
    return %arg0, %c0_i32 : i32, i32
  }
  func.func @transform_4(%arg0: i32) -> (i32, i32) {
    %c0_i32 = arith.constant 0 : i32
    %c0_i32_0 = arith.constant 0 : i32
    return %arg0, %c0_i32 : i32, i32
  }
}

</mosaic_0001>

<llo_original>
// kernel: tpu_custom_call.1
$region0: #{tpu_custom_call.1}
  #allocation0 [shape = 'u32[]', space=smem, size = 0x4, offset = 0x4, fixed_abs, tag = 'smem constant byte address 0x4 - core index']
  #allocation1 [shape = 'u32[72,128]{1,0:T(1,128)}', space=vmem, size = 0x9000, scoped, tag = 'internal scratch']
  %s0 = inlined_call_operand.vmem [shape: bf16[32,128], index: 0, kind: input, shape index: {}]
  %s1 = inlined_call_operand.vmem [shape: f32[8,128], index: 1, kind: input, shape index: {}]
  %s2 = inlined_call_operand.hbm [shape: bf16[16,32], index: 2, kind: input, shape index: {}]
  %s3 = inlined_call_operand.vmem [shape: f32[16,8], index: 3, kind: input, shape index: {}]
  %s4 = inlined_call_operand.hbm [shape: f32[16,18], index: 4, kind: output, shape index: {}]
  %s5 = sld [smem:[#allocation0]]
  $region30: #{tpu_custom_call.1} parent=0
    _
  %s7 = ssub.s32 1, %s5
  %s8 = scalar_select 0, %s7, %s5
  $region1: #{tpu_custom_call.1} parent=0
    #allocation2 [shape = 'u8[4096]{0}', space=vmem, size = 0x1000, scoped, tag = 'input window, operand 2, single buffered']
    #allocation3 [shape = 's32[1]{0}', space=sflag, size = 0x4, scoped, tag = 'scoped memory for tpu_custom_call.1']
    #allocation4 [shape = 's32[1]{0}', space=sflag, size = 0x4, scoped, tag = 'scoped memory for tpu_custom_call.1']
    #allocation5 [shape = 'u8[8192]{0}', space=vmem, size = 0x2000, scoped, tag = 'output window, operand 0, single buffered']
    %9 = vsyncpa [#allocation3], 0
    %10 = vsyncpa [#allocation4], 0
    // Predicated region
    $region2: #{tpu_custom_call.1} parent=1 // pred_check
      _
    $region3: #{tpu_custom_call.1} parent=1 // pred_check_branch
      %12 = sbr.rel (0) target = $region5
    $region4: #{tpu_custom_call.1} parent=1 // pred_region
      _
    $region5: #{tpu_custom_call.1} parent=1 // pred_fallthru
      _
    // Predicated region
    $region6: #{tpu_custom_call.1} parent=1 // pred_check
      _
    $region7: #{tpu_custom_call.1} parent=1 // pred_check_branch
      %14 = sbr.rel (0) target = $region9
    $region8: #{tpu_custom_call.1} parent=1 // pred_region
      _
    $region9: #{tpu_custom_call.1} parent=1 // pred_fallthru
      _
    // Predicated region
    $region10: #{tpu_custom_call.1} parent=1 // pred_check
      _
    $region11: #{tpu_custom_call.1} parent=1 // pred_check_branch
      %16 = sbr.rel (0) target = $region13
    $region12: #{tpu_custom_call.1} parent=1 // pred_region
      %18 = vsyncadd [#allocation3], 0
      %s19 = sshll.u32 %s2, 4
      %s20 = int_to_ptr.hbm [resolvable:$true] %s19
      %s21 = sshll.u32 [#allocation2], 4
      %s22 = int_to_ptr.vmem [resolvable:$true] %s21
      %27 = dma.hbm_to_vmem [thread:$0]  %s20, 128, %s22, [#allocation3], 64, 64, 4
    $region13: #{tpu_custom_call.1} parent=1 // pred_fallthru
      _
    // Predicated region
    $region14: #{tpu_custom_call.1} parent=1 // pred_check
      _
    $region15: #{tpu_custom_call.1} parent=1 // pred_check_branch
      %29 = sbr.rel (0) target = $region17
    $region16: #{tpu_custom_call.1} parent=1 // pred_region
      _
    $region17: #{tpu_custom_call.1} parent=1 // pred_fallthru
      _
    // Predicated region
    $region18: #{tpu_custom_call.1} parent=1 // pred_check
      _
    $region19: #{tpu_custom_call.1} parent=1 // pred_check_branch
      %31 = sbr.rel (0) target = $region21
    $region20: #{tpu_custom_call.1} parent=1 // pred_region
      %33 = dma.done [#allocation3], 128
    $region21: #{tpu_custom_call.1} parent=1 // pred_fallthru
      _
    %v35 = vld [vmem:[#allocation2] sm:$0xf]
    %v36 = vld [vmem:[#allocation2 + $0x4] sm:$0xf]
    %v37 = vld [vmem:[%s0] sm:$0xf]
    %v38 = vld [vmem:[%s0 + $0x4] sm:$0xf]
    %v39 = vld [vmem:[%s0 + $0x8] sm:$0xf]
    %v40 = vld [vmem:[%s0 + $0xc] sm:$0xf]
    %v41 = vld [vmem:[%s1] sm:$0x1]
    %v42 = vperm.slane %v41, 0
    %v45 = vunpack.c.l.b16 %v35
    %v46 = vunpack.c.l.b16 %v36
    %v47 = vpack.c.b16 %v46, %v45
    %v52 = vunpack.c.l.b16 %v37
    %v53 = vunpack.c.l.b16 %v38
    %v54 = vunpack.c.l.b16 %v39
    %v55 = vunpack.c.l.b16 %v40
    %v56 = vpack.c.b16 %v53, %v52
    %v57 = vpack.c.b16 %v55, %v54
    %vm60 = vcmask 261120
    %v62 = vsel %vm60, %v47, 0
    %64 = vmatpush.bf16.msra.mxu0 0
    %65 = vmatpush.bf16.msra.mxu0 0
    %66 = vmatpush.bf16.msra.mxu0 0
    %67 = vmatpush.bf16.msra.mxu0 0
    %68 = vmatpush.bf16.msra.mxu0 0
    %69 = vmatpush.bf16.msra.mxu0 0
    %70 = vmatpush.bf16.msra.mxu0 %v57
    %71 = vmatpush.bf16.msra.mxu0 %v56
    %72 = vmatmul.bf16.gmra.mxu0 %v62
    %v73 = vpop.f32.mrf.mxu0
    %v74 = vadd.f32 %v42, %v73
    %v75 = vpop.f32.mrf.mxu0
    %v76 = vadd.f32 %v42, %v75
    %77 = vdwg.mxu0
    %v78 = vtanh.pop %v74
    %v79 = vtanh.pop %v76
    %v80 = vld [vmem:[%s1 + $0x1] sm:$0x1]
    %v81 = vld [vmem:[%s1 + $0x2] sm:$0x1]
    %v82 = vld [vmem:[%s1 + $0x3] sm:$0x1]
    %v83 = vld [vmem:[%s3] sm:$0xff]
    %v84 = vld [vmem:[%s3 + $0x8] sm:$0xff]
    %v85 = vperm.slane %v80, 0
    %v86 = vmul.f32 %v85, %v83
    %v87 = vmul.f32 %v85, %v84
    %v88 = vadd.f32 %v78, %v86
    %v89 = vadd.f32 %v79, %v87
    %v90 = vsub.f32 %v88, %v78
    %v91 = vsub.f32 %v89, %v79
    %v92 = vmul.f32 %v90, %v90
    %v93 = vmul.f32 %v91, %v91
    %v94 = vperm.slane %v81, 0
    %v95 = vmul.f32 %v94, %v92
    %v96 = vmul.f32 %v94, %v93
    %vm97 = vcmask 64512
    %v98 = vsel %vm97, %v95, 0.0
    %99 = vadd.xlane.f32.xlu0 %v98
    %v100 = vpop.xlane.xlu0 %99
    %v101 = vsel %vm97, %v96, 0.0
    %102 = vadd.xlane.f32.xlu0 %v101
    %v103 = vpop.xlane.xlu0 %102
    %v104 = vperm.slane %v82, 0
    %v105 = vadd.f32 %v100, %v104
    %v106 = vadd.f32 %v103, %v104
    %107 = vst.msk [vmem:[#allocation5] sm:$0xff] %vm97, %v88
    %108 = vst.msk [vmem:[#allocation5 + $0x8] sm:$0xff] %vm97, %v89
    %111 = vrot.lane.b32.xlu0 %v78, 8
    %v112 = vpop.permute.xlu0 %111
    %113 = vrot.lane.b32.xlu0 %v79, 8
    %v114 = vpop.permute.xlu0 %113
    %vm117 = vcmask 130112
    %118 = vst.msk [vmem:[#allocation5] sm:$0xff] %vm117, %v112
    %119 = vst.msk [vmem:[#allocation5 + $0x8] sm:$0xff] %vm117, %v114
    %122 = vrot.lane.b32.xlu0 %v105, 16
    %v123 = vpop.permute.xlu0 %122
    %124 = vrot.lane.b32.xlu0 %v106, 16
    %v125 = vpop.permute.xlu0 %124
    %vm128 = vcmask 138368
    %129 = vst.msk [vmem:[#allocation5] sm:$0xff] %vm128, %v123
    %130 = vst.msk [vmem:[#allocation5 + $0x8] sm:$0xff] %vm128, %v125
    %133 = vrot.lane.b32.xlu0 %v74, 9
    %v134 = vpop.permute.xlu0 %133
    %135 = vrot.lane.b32.xlu0 %v76, 9
    %v136 = vpop.permute.xlu0 %135
    %vm139 = vcmask 146568
    %140 = vst.msk [vmem:[#allocation5] sm:$0xff] %vm139, %v134
    %141 = vst.msk [vmem:[#allocation5 + $0x8] sm:$0xff] %vm139, %v136
    // Predicated region
    $region22: #{tpu_custom_call.1} parent=1 // pred_check
      _
    $region23: #{tpu_custom_call.1} parent=1 // pred_check_branch
      %143 = sbr.rel (0) target = $region25
    $region24: #{tpu_custom_call.1} parent=1 // pred_region
      %145 = vsyncadd [#allocation4], 0
      %s146 = sshll.u32 [#allocation5], 4
      %s147 = int_to_ptr.vmem [resolvable:$true] %s146
      %s148 = sshll.u32 %s4, 4
      %s149 = int_to_ptr.hbm [resolvable:$true] %s148
      %154 = dma.vmem_to_hbm [thread:$0]  %s147, 256, %s149, [#allocation4], 128, 128, 8
    $region25: #{tpu_custom_call.1} parent=1 // pred_fallthru
      _
    // Predicated region
    $region26: #{tpu_custom_call.1} parent=1 // pred_check
      _
    $region27: #{tpu_custom_call.1} parent=1 // pred_check_branch
      %156 = sbr.rel (0) target = $region29
    $region28: #{tpu_custom_call.1} parent=1 // pred_region
      %158 = dma.done [#allocation4], 256
    $region29: #{tpu_custom_call.1} parent=1 // pred_fallthru
      _
    %159 = vsyncpa [#allocation3], 1
    %160 = vsyncpa [#allocation4], 1

</llo_original>
